<compile_context>
chip_gen: v5e
topology: v5e:2x2
jax: 0.10.0
libtpu: 0.0.40
codegen_flags: <defaults>
</compile_context>

<pallas_src>
import functools
import math

import jax
import jax.numpy as jnp
from jax.experimental import pallas as pl
from jax.experimental.pallas import tpu as pltpu


def _basic_block_kernel(x_ref, w1_ref, w2_ref, bias_ref, o_ref, *, h):
    # x_ref   : (TM, W*Cin_p)         f32, TM = G*h rows (G whole images)
    # w1_ref  : (3*W*Cin_p, 2*W*Co)   bf16 [conv1 banded | 1x1-downsample blockdiag]
    # w2_ref  : (3*W*Co, W*Co)        bf16 conv2 banded weights
    # bias_ref: (2, 2*W*Co)           f32  row0 = [b1 | b_down], row1 = [b2 | 0]
    # o_ref   : (TM, W*Co)            bf16
    tm, wco = o_ref.shape
    cdt = w1_ref.dtype

    # (row % h) masks: zero the dy=-1 tap on the first row of every image and
    # the dy=+1 tap on the last row (SAME zero padding, no cross-image leak).
    r = jax.lax.broadcasted_iota(jnp.int32, (tm, 1), 0) % h
    not_first = r > 0
    not_last = r < h - 1

    def dy_taps(a):  # fuse the 3 dy taps along K via sublane roll + masks
        up = jnp.where(not_first, pltpu.roll(a, 1, axis=0), 0.0)      # a[y-1]
        dn = jnp.where(not_last, pltpu.roll(a, tm - 1, axis=0), 0.0)  # a[y+1]
        return jnp.concatenate([up, a, dn], axis=-1)

    # ---- conv1 (+ fused 1x1 downsample): one matmul ----
    x = x_ref[...]                                              # f32
    p1 = jnp.dot(dy_taps(x).astype(cdt), w1_ref[...],
                 preferred_element_type=jnp.float32)            # (TM, 2*W*Co)
    p1 = p1 + bias_ref[0:1, :]                                  # bn1 | bn_down biases
    h1 = jnp.maximum(p1[:, :wco], 0.0)                          # relu(conv1 + bn1)
    idn = p1[:, wco:]                                           # downsample identity

    # ---- conv2 ----
    p2 = jnp.dot(dy_taps(h1).astype(cdt), w2_ref[...],
                 preferred_element_type=jnp.float32)            # (TM, W*Co)

    # ---- bn2 + residual add + relu (f32 epilogue, bf16 store) ----
    o_ref[...] = jnp.maximum(p2 + bias_ref[1:2, :wco] + idn,
                             0.0).astype(o_ref.dtype)


def _banded_weight(w_hwio, W):
    """(kh,kw,Ci,Co) HWIO conv weight -> (kh, W*Ci, W*Co) banded matrices that
    apply all kw taps (with 'SAME' zero padding) as a single matmul per dy."""
    kh, kw, Ci, Co = w_hwio.shape
    xx = jnp.arange(W)[:, None]               # input column
    x = jnp.arange(W)[None, :]                # output column
    d = xx - x + (kw // 2)                    # tap index
    valid = ((d >= 0) & (d < kw)).astype(w_hwio.dtype)
    band = w_hwio[:, jnp.clip(d, 0, kw - 1)] * valid[None, :, :, None, None]
    # (kh, xx, x, Ci, Co) -> (kh, xx, Ci, x, Co) -> (kh, W*Ci, W*Co)
    return band.transpose(0, 1, 3, 2, 4).reshape(kh, W * Ci, W * Co)


def _pad_channels_for_lanes(c, W):
    """Smallest c' >= c with (W * c') % 128 == 0 (dense 128-lane input layout)."""
    step = 128 // math.gcd(W, 128)
    return ((c + step - 1) // step) * step


def prepare_basic_block_params(w1, w2, wd, s1, b1, s2, b2, sd, bd, *, width):
    """One-time (per model) preprocessing: fold eval-mode BN scales into the
    conv weights, build banded MXU weights, pack biases.  Hoisted out of the
    per-call path so it never competes with the forward pass for HBM BW."""
    W = width
    Cin, Cout = w1.shape[2], w1.shape[3]
    assert (W * Cout) % 128 == 0, "W*Cout must be a multiple of 128 (dense output lanes)"
    cin_p = _pad_channels_for_lanes(Cin, W)
    wci, wco = W * cin_p, W * Cout

    def pad_ci(w):  # zero-pad input channels (lane density of x)
        return jnp.pad(w, ((0, 0), (0, 0), (0, cin_p - Cin), (0, 0)))

    # Fold BN scales into conv weights; build banded (Toeplitz) matmul weights.
    t1 = _banded_weight(pad_ci(w1 * s1.reshape(-1)), W)        # (3, wci, wco)
    t2 = _banded_weight(w2 * s2.reshape(-1), W)                # (3, wco, wco)

    # 1x1 downsample as a block-diagonal (wci, wco) matrix, fused as extra
    # output columns of conv1 (nonzero only in the middle dy band).
    wdf = pad_ci(wd * sd.reshape(-1)).reshape(cin_p, Cout)
    dsm = jnp.einsum('ab,ij->aibj', jnp.eye(W, dtype=wdf.dtype), wdf)
    ds_col = jnp.zeros((3 * wci, wco), jnp.float32
                       ).at[wci:2 * wci].set(dsm.reshape(wci, wco))

    w1c = jnp.concatenate([t1.reshape(3 * wci, wco), ds_col],
                          axis=1).astype(jnp.bfloat16)          # (3*wci, 2*wco)
    w2c = t2.reshape(3 * wco, wco).astype(jnp.bfloat16)         # (3*wco, wco)

    # Single packed bias operand: row0 = [b1 | b_down], row1 = [b2 | 0].
    tile = lambda b: jnp.tile(b.reshape(-1), W).astype(jnp.float32)
    bias = jnp.stack([
        jnp.concatenate([tile(b1), tile(bd)]),
        jnp.concatenate([tile(b2), jnp.zeros((wco,), jnp.float32)]),
    ])                                                          # (2, 2*wco)
    return w1c, w2c, bias


@functools.partial(jax.jit, static_argnames=("rows_per_step", "out_dtype"))
def basic_block_apply(x_nchw, w1c, w2c, bias, *, rows_per_step=None,
                      out_dtype=jnp.bfloat16):
    B, Cin, H, W = x_nchw.shape
    wco = w2c.shape[1]
    Cout = wco // W
    k1u = w1c.shape[0] // 3            # = W * Cin_p (lane-padded input width)
    cin_p = k1u // W
    m_total = B * H

    # NCHW -> (B*H, W*Cin_p) f32 rows (zero-pad channels to a 128-lane multiple).
    x = jnp.transpose(x_nchw, (0, 2, 3, 1)).astype(jnp.float32)
    x = jnp.pad(x, ((0, 0), (0, 0), (0, 0), (0, cin_p - Cin)))
    x2d = x.reshape(m_total, k1u)

    # Rows (M) per grid step: a band of G whole images.  Target >= 256 rows so
    # the MXU is not fill/drain bound; bands are independent ("parallel"), so
    # with >= 2 bands both v7x TensorCores get work at realistic batch sizes.
    if rows_per_step is None:
        g = max(1, min(B, 256 // H))
        tm = g * H
        if tm % 8 != 0:                # (8,128) sublane rule; fall back to one band
            tm = m_total
    else:
        tm = rows_per_step
    n_steps = pl.cdiv(m_total, tm)

    kernel = functools.partial(_basic_block_kernel, h=H)
    cost = pl.CostEstimate(
        flops=2 * m_total * (3 * k1u) * (2 * wco) + 2 * m_total * (3 * wco) * wco,
        transcendentals=0,
        bytes_accessed=(x2d.size * 4 + w1c.size * 2 + w2c.size * 2
                        + bias.size * 4 + m_total * wco * 2),
    )

    out = pl.pallas_call(
        kernel,
        out_shape=jax.ShapeDtypeStruct((m_total, wco), out_dtype),
        grid_spec=pltpu.PrefetchScalarGridSpec(
            num_scalar_prefetch=0,
            grid=(n_steps,),
            in_specs=[
                pl.BlockSpec((tm, k1u), lambda i: (i, 0)),       # x band
                pl.BlockSpec(w1c.shape, lambda i: (0, 0)),       # VMEM-resident
                pl.BlockSpec(w2c.shape, lambda i: (0, 0)),       # VMEM-resident
                pl.BlockSpec(bias.shape, lambda i: (0, 0)),      # packed biases
            ],
            out_specs=pl.BlockSpec((tm, wco), lambda i: (i, 0)),
        ),
        compiler_params=pltpu.CompilerParams(
            dimension_semantics=("parallel",)),
        cost_estimate=cost,
    )(x2d, w1c, w2c, bias)

    # (B*H, W*Cout) -> NCHW to match the PyTorch module.  (A channels-last
    # consumer could skip this transpose and read `out` directly.)
    return jnp.transpose(out.reshape(B, H, W, Cout), (0, 3, 1, 2))


# ----------------------------- references / test -----------------------------

def _fold_bn(key, planes, eps=1e-5):
    k1, k2, k3, k4 = jax.random.split(key, 4)
    gamma = jax.random.uniform(k1, (planes,), jnp.float32, 0.5, 1.5)
    beta = jax.random.normal(k2, (planes,), jnp.float32) * 0.1
    mean = jax.random.normal(k3, (planes,), jnp.float32) * 0.1
    var = jax.random.uniform(k4, (planes,), jnp.float32, 0.5, 1.5)
    scale = gamma / jnp.sqrt(var + eps)
    bias = beta - mean * scale
    return scale.reshape(1, planes), bias.reshape(1, planes)


def _conv_same(v, w):
    return jax.lax.conv_general_dilated(
        v, w, (1, 1), 'SAME', dimension_numbers=('NHWC', 'HWIO', 'NHWC'))


def _ref_basic_block(x_nchw, w1, w2, wd, s1, b1, s2, b2, sd, bd):
    # Pure-JAX f32 reference (true module semantics, eval-mode BN).
    x = jnp.transpose(x_nchw, (0, 2, 3, 1))
    out = jnp.maximum(_conv_same(x, w1) * s1 + b1, 0.0)
    out = _conv_same(out, w2) * s2 + b2
    idn = _conv_same(x, wd) * sd + bd
    return jnp.transpose(jnp.maximum(out + idn, 0.0), (0, 3, 1, 2))


def _ref_basic_block_bf16(x_nchw, w1, w2, wd, s1, b1, s2, b2, sd, bd):
    # Reference with the same bf16 operand rounding as the kernel's MXU inputs.
    r = lambda a: a.astype(jnp.bfloat16).astype(jnp.float32)
    x = r(jnp.transpose(x_nchw, (0, 2, 3, 1)))
    w1f, w2f = r(w1 * s1.reshape(-1)), r(w2 * s2.reshape(-1))
    wdf = r(wd * sd.reshape(-1))
    h1 = jnp.maximum(_conv_same(x, w1f) + b1, 0.0)
    out = _conv_same(r(h1), w2f) + b2
    idn = _conv_same(x, wdf) + bd
    return jnp.transpose(jnp.maximum(out + idn, 0.0), (0, 3, 1, 2))


if __name__ == "__main__":
    inplanes, planes = 4, 8
    B, H, W = 2, 16, 16

    key = jax.random.PRNGKey(0)
    keys = jax.random.split(key, 8)

    # Conv weights stored HWIO (equivalent to transposing torch's OIHW).
    w1 = jax.random.normal(keys[0], (3, 3, inplanes, planes), jnp.float32) * 0.1
    w2 = jax.random.normal(keys[1], (3, 3, planes, planes), jnp.float32) * 0.1
    wd = jax.random.normal(keys[2], (1, 1, inplanes, planes), jnp.float32) * 0.1

    # Folded (eval-mode) BatchNorm parameters.
    s1, b1 = _fold_bn(keys[3], planes)
    s2, b2 = _fold_bn(keys[4], planes)
    sd, bd = _fold_bn(keys[5], planes)

    x = jax.random.normal(keys[6], (B, inplanes, H, W), jnp.float32)

    # One-time weight preprocessing (hoisted out of the per-call forward path).
    w1c, w2c, bias = jax.block_until_ready(
        prepare_basic_block_params(w1, w2, wd, s1, b1, s2, b2, sd, bd, width=W))

    y = basic_block_apply(x, w1c, w2c, bias)
    y = jax.block_until_ready(y)
    assert y.shape == (B, planes, H, W), y.shape
    yf32 = y.astype(jnp.float32)

    # Tight check vs a reference with matched bf16 operand rounding (the bf16
    # output store adds at most ~1 ulp on top).
    y16 = _ref_basic_block_bf16(x, w1, w2, wd, s1, b1, s2, b2, sd, bd)
    err16 = float(jnp.max(jnp.abs(yf32 - y16)))
    assert err16 < 3e-2, err16

    # Loose check vs the pure f32 reference (bf16 matmul operands + bf16 store).
    yf = _ref_basic_block(x, w1, w2, wd, s1, b1, s2, b2, sd, bd)
    errf = float(jnp.max(jnp.abs(yf32 - yf)))
    assert errf < 1.5e-1, errf

    print("KERNEL_OK")
</pallas_src>

<mosaic_0001>
module attributes {stable_mosaic.version = 11 : i64} {
  func.func @_basic_block_kernel(%arg0: i32, %arg1: memref<32x128xf32, #tpu.memory_space<vmem>>, %arg2: memref<384x256xbf16, #tpu.memory_space<vmem>>, %arg3: memref<384x128xbf16, #tpu.memory_space<vmem>>, %arg4: memref<2x256xf32, #tpu.memory_space<vmem>>, %arg5: memref<32x128xbf16, #tpu.memory_space<vmem>>) attributes {dimension_semantics = [#tpu.dimension_semantics<parallel>], iteration_bounds = array<i64: 1>, scalar_prefetch = 0 : i64, scratch_operands = 0 : i64, tpu.core_type = #tpu.core_type<tc>, window_params = [{transform_indices = @transform_0, window_bounds = array<i64: 32, 128>}, {pipeline_mode = #tpu.pipeline_mode<synchronous>, transform_indices = @transform_1, window_bounds = array<i64: 384, 256>}, {pipeline_mode = #tpu.pipeline_mode<synchronous>, transform_indices = @transform_2, window_bounds = array<i64: 384, 128>}, {pipeline_mode = #tpu.pipeline_mode<synchronous>, transform_indices = @transform_3, window_bounds = array<i64: 2, 256>}, {transform_indices = @transform_4, window_bounds = array<i64: 32, 128>}]} {
    %0 = tpu.iota {dimensions = array<i32: 0>} : vector<32x1xi32>
    %c16_i32 = arith.constant 16 : i32
    %c0_i32 = arith.constant 0 : i32
    %1 = arith.cmpi eq, %c16_i32, %c0_i32 : i32
    %c1_i32 = arith.constant 1 : i32
    %2 = arith.select %1, %c1_i32, %c16_i32 : i32
    %3 = vector.broadcast %2 : i32 to vector<32x1xi32>
    %4 = arith.remsi %0, %3 : vector<32x1xi32>
    %c0_i32_0 = arith.constant 0 : i32
    %5 = vector.broadcast %c0_i32_0 : i32 to vector<32x1xi32>
    %6 = arith.cmpi ne, %4, %5 : vector<32x1xi32>
    %c0_i32_1 = arith.constant 0 : i32
    %7 = vector.broadcast %c0_i32_1 : i32 to vector<32x1xi32>
    %8 = arith.cmpi slt, %4, %7 : vector<32x1xi32>
    %c0_i32_2 = arith.constant 0 : i32
    %9 = arith.cmpi slt, %2, %c0_i32_2 : i32
    %10 = vector.broadcast %9 : i1 to vector<32x1xi1>
    %11 = vector.broadcast %10 : vector<32x1xi1> to vector<32x1xi1>
    %12 = arith.xori %8, %11 : vector<32x1xi1>
    %13 = arith.andi %12, %6 : vector<32x1xi1>
    %14 = vector.broadcast %2 : i32 to vector<32x1xi32>
    %15 = arith.addi %4, %14 : vector<32x1xi32>
    %16 = arith.select %13, %15, %4 : vector<32x1xi1>, vector<32x1xi32>
    %c0_i32_3 = arith.constant 0 : i32
    %17 = vector.broadcast %c0_i32_3 : i32 to vector<32x1xi32>
    %18 = arith.cmpi sgt, %16, %17 : vector<32x1xi32>
    %c15_i32 = arith.constant 15 : i32
    %19 = vector.broadcast %c15_i32 : i32 to vector<32x1xi32>
    %20 = arith.cmpi slt, %16, %19 : vector<32x1xi32>
    %c0 = arith.constant 0 : index
    %c0_4 = arith.constant 0 : index
    %21 = vector.load %arg1[%c0, %c0_4] : memref<32x128xf32, #tpu.memory_space<vmem>>, vector<32x128xf32>
    %c1_i32_5 = arith.constant 1 : i32
    %22 = tpu.dynamic_rotate %21 by %c1_i32_5 dim 0 : vector<32x128xf32>, i32 -> vector<32x128xf32>
    %cst = arith.constant 0.000000e+00 : f32
    %23 = vector.shape_cast %18 : vector<32x1xi1> to vector<32x1xi1>
    %24 = vector.broadcast %23 : vector<32x1xi1> to vector<32x128xi1>
    %25 = vector.broadcast %cst : f32 to vector<32x128xf32>
    %26 = arith.select %24, %22, %25 : vector<32x128xi1>, vector<32x128xf32>
    %c31_i32 = arith.constant 31 : i32
    %27 = tpu.dynamic_rotate %21 by %c31_i32 dim 0 : vector<32x128xf32>, i32 -> vector<32x128xf32>
    %cst_6 = arith.constant 0.000000e+00 : f32
    %28 = vector.shape_cast %20 : vector<32x1xi1> to vector<32x1xi1>
    %29 = vector.broadcast %28 : vector<32x1xi1> to vector<32x128xi1>
    %30 = vector.broadcast %cst_6 : f32 to vector<32x128xf32>
    %31 = arith.select %29, %27, %30 : vector<32x128xi1>, vector<32x128xf32>
    %32 = tpu.concatenate %26, %21, %31 in 1 : vector<32x128xf32>, vector<32x128xf32>, vector<32x128xf32> -> vector<32x384xf32>
    %33 = arith.truncf %32 : vector<32x384xf32> to vector<32x384xbf16>
    %c0_7 = arith.constant 0 : index
    %c0_8 = arith.constant 0 : index
    %34 = vector.load %arg2[%c0_7, %c0_8] : memref<384x256xbf16, #tpu.memory_space<vmem>>, vector<384x256xbf16>
    %cst_9 = arith.constant dense<0.000000e+00> : vector<32x256xf32>
    %35 = tpu.matmul %33, %34, %cst_9 {dimension_numbers = #tpu.dot_dimension_numbers<[1], [0], [0], [1], [0, 0, 1, 1], [], []>} : vector<32x384xbf16>, vector<384x256xbf16>, vector<32x256xf32> -> vector<32x256xf32>
    %c0_10 = arith.constant 0 : index
    %c0_11 = arith.constant 0 : index
    %36 = vector.load %arg4[%c0_10, %c0_11] : memref<2x256xf32, #tpu.memory_space<vmem>>, vector<1x256xf32>
    %37 = vector.broadcast %36 : vector<1x256xf32> to vector<32x256xf32>
    %38 = arith.addf %35, %37 : vector<32x256xf32>
    %39 = vector.extract_strided_slice %38 {offsets = [0, 0], sizes = [32, 128], strides = [1, 1]} : vector<32x256xf32> to vector<32x128xf32>
    %cst_12 = arith.constant 0.000000e+00 : f32
    %40 = vector.broadcast %cst_12 : f32 to vector<32x128xf32>
    %41 = arith.maximumf %39, %40 : vector<32x128xf32>
    %42 = vector.extract_strided_slice %38 {offsets = [0, 128], sizes = [32, 128], strides = [1, 1]} : vector<32x256xf32> to vector<32x128xf32>
    %c1_i32_13 = arith.constant 1 : i32
    %43 = tpu.dynamic_rotate %41 by %c1_i32_13 dim 0 : vector<32x128xf32>, i32 -> vector<32x128xf32>
    %cst_14 = arith.constant 0.000000e+00 : f32
    %44 = vector.shape_cast %18 : vector<32x1xi1> to vector<32x1xi1>
    %45 = vector.broadcast %44 : vector<32x1xi1> to vector<32x128xi1>
    %46 = vector.broadcast %cst_14 : f32 to vector<32x128xf32>
    %47 = arith.select %45, %43, %46 : vector<32x128xi1>, vector<32x128xf32>
    %c31_i32_15 = arith.constant 31 : i32
    %48 = tpu.dynamic_rotate %41 by %c31_i32_15 dim 0 : vector<32x128xf32>, i32 -> vector<32x128xf32>
    %cst_16 = arith.constant 0.000000e+00 : f32
    %49 = vector.shape_cast %20 : vector<32x1xi1> to vector<32x1xi1>
    %50 = vector.broadcast %49 : vector<32x1xi1> to vector<32x128xi1>
    %51 = vector.broadcast %cst_16 : f32 to vector<32x128xf32>
    %52 = arith.select %50, %48, %51 : vector<32x128xi1>, vector<32x128xf32>
    %53 = tpu.concatenate %47, %41, %52 in 1 : vector<32x128xf32>, vector<32x128xf32>, vector<32x128xf32> -> vector<32x384xf32>
    %54 = arith.truncf %53 : vector<32x384xf32> to vector<32x384xbf16>
    %c0_17 = arith.constant 0 : index
    %c0_18 = arith.constant 0 : index
    %55 = vector.load %arg3[%c0_17, %c0_18] : memref<384x128xbf16, #tpu.memory_space<vmem>>, vector<384x128xbf16>
    %cst_19 = arith.constant dense<0.000000e+00> : vector<32x128xf32>
    %56 = tpu.matmul %54, %55, %cst_19 {dimension_numbers = #tpu.dot_dimension_numbers<[1], [0], [0], [1], [0, 0, 1, 1], [], []>} : vector<32x384xbf16>, vector<384x128xbf16>, vector<32x128xf32> -> vector<32x128xf32>
    %c1 = arith.constant 1 : index
    %c0_20 = arith.constant 0 : index
    %57 = vector.load %arg4[%c1, %c0_20] : memref<2x256xf32, #tpu.memory_space<vmem>>, vector<1x128xf32>
    %58 = vector.broadcast %57 : vector<1x128xf32> to vector<32x128xf32>
    %59 = arith.addf %56, %58 : vector<32x128xf32>
    %60 = arith.addf %59, %42 : vector<32x128xf32>
    %cst_21 = arith.constant 0.000000e+00 : f32
    %61 = vector.broadcast %cst_21 : f32 to vector<32x128xf32>
    %62 = arith.maximumf %60, %61 : vector<32x128xf32>
    %63 = arith.truncf %62 : vector<32x128xf32> to vector<32x128xbf16>
    %c0_22 = arith.constant 0 : index
    %c0_23 = arith.constant 0 : index
    %64 = vector.load %arg5[%c0_22, %c0_23] : memref<32x128xbf16, #tpu.memory_space<vmem>>, vector<32x128xbf16>
    tpu.vector_store %arg5[%c0_22, %c0_23], %63 {strides = array<i32>} : memref<32x128xbf16, #tpu.memory_space<vmem>>, vector<32x128xbf16>,
    return
  }
  func.func @transform_0(%arg0: i32) -> (i32, i32) {
    %c0_i32 = arith.constant 0 : i32
    %c0_i32_0 = arith.constant 0 : i32
    return %arg0, %c0_i32 : i32, i32
  }
  func.func @transform_1(%arg0: i32) -> (i32, i32) {
    %c0_i32 = arith.constant 0 : i32
    %c0_i32_0 = arith.constant 0 : i32
    %c0_i32_1 = arith.constant 0 : i32
    return %c0_i32, %c0_i32_0 : i32, i32
  }
  func.func @transform_2(%arg0: i32) -> (i32, i32) {
    %c0_i32 = arith.constant 0 : i32
    %c0_i32_0 = arith.constant 0 : i32
    %c0_i32_1 = arith.constant 0 : i32
    return %c0_i32, %c0_i32_0 : i32, i32
  }
  func.func @transform_3(%arg0: i32) -> (i32, i32) {
    %c0_i32 = arith.constant 0 : i32
    %c0_i32_0 = arith.constant 0 : i32
    %c0_i32_1 = arith.constant 0 : i32
    return %c0_i32, %c0_i32_0 : i32, i32
  }
  func.func @transform_4(%arg0: i32) -> (i32, i32) {
    %c0_i32 = arith.constant 0 : i32
    %c0_i32_0 = arith.constant 0 : i32
    return %arg0, %c0_i32 : i32, i32
  }
}

</mosaic_0001>

<llo_original>
// kernel: basic_block_apply.1
$region0: #{basic_block_apply.1}
  #allocation0 [shape = 'u32[]', space=smem, size = 0x4, offset = 0x4, fixed_abs, tag = 'smem constant byte address 0x4 - core index']
  #allocation1 [shape = 'u32[72,128]{1,0:T(1,128)}', space=vmem, size = 0x9000, scoped, tag = 'internal scratch']
  %s0 = inlined_call_operand.vmem [shape: f32[32,128], index: 0, kind: input, shape index: {}]
  %s1 = inlined_call_operand.vmem [shape: bf16[384,256], index: 1, kind: input, shape index: {}]
  %s2 = inlined_call_operand.vmem [shape: bf16[384,128], index: 2, kind: input, shape index: {}]
  %s3 = inlined_call_operand.vmem [shape: f32[2,256], index: 3, kind: input, shape index: {}]
  %s4 = inlined_call_operand.vmem [shape: bf16[32,128], index: 4, kind: output, shape index: {}]
  %s5 = sld [smem:[#allocation0]]
  $region26: #{basic_block_apply.1} parent=0
    _
  %s7 = ssub.s32 1, %s5
  %s8 = scalar_select 0, %s7, %s5
  // Predicated region
  $region2: #{basic_block_apply.1} parent=0 // pred_check
    _
  $region3: #{basic_block_apply.1} parent=0 // pred_check_branch
    %10 = sbr.rel (0) target = $region5
  $region4: #{basic_block_apply.1} parent=0 // pred_region
    _
  $region5: #{basic_block_apply.1} parent=0 // pred_fallthru
    _
  // Predicated region
  $region6: #{basic_block_apply.1} parent=0 // pred_check
    _
  $region7: #{basic_block_apply.1} parent=0 // pred_check_branch
    %12 = sbr.rel (0) target = $region9
  $region8: #{basic_block_apply.1} parent=0 // pred_region
    _
  $region9: #{basic_block_apply.1} parent=0 // pred_fallthru
    _
  // Predicated region
  $region10: #{basic_block_apply.1} parent=0 // pred_check
    _
  $region11: #{basic_block_apply.1} parent=0 // pred_check_branch
    %14 = sbr.rel (0) target = $region13
  $region12: #{basic_block_apply.1} parent=0 // pred_region
    _
  $region13: #{basic_block_apply.1} parent=0 // pred_fallthru
    _
  // Predicated region
  $region14: #{basic_block_apply.1} parent=0 // pred_check
    _
  $region15: #{basic_block_apply.1} parent=0 // pred_check_branch
    %16 = sbr.rel (0) target = $region17
  $region16: #{basic_block_apply.1} parent=0 // pred_region
    _
  $region17: #{basic_block_apply.1} parent=0 // pred_fallthru
    _
  %v17 = vlaneseq
  %v18 = vshrl.u32 %v17, 7
  %v19 = vadd.s32 %v18, 8
  %v20 = vadd.s32 %v18, 16
  %v21 = vadd.s32 %v18, 24
  %vm22 = vcmp.lt.s32.totalorder %v18, 0
  %v23 = vsub.s32 0, %v18
  %v24 = vsel %vm22, %v23, %v18
  %v25 = vshrl.u32 %v24, 4
  %v26 = vand.u32 %v24, 15
  %v27 = vsub.s32 0, %v26
  %v28 = vsel %vm22, %v27, %v26
  %vm29 = vcmp.lt.s32.totalorder %v19, 0
  %v30 = vsub.s32 0, %v19
  %v31 = vsel %vm29, %v30, %v19
  %v32 = vshrl.u32 %v31, 4
  %v33 = vand.u32 %v31, 15
  %v34 = vsub.s32 0, %v33
  %v35 = vsel %vm29, %v34, %v33
  %vm36 = vcmp.lt.s32.totalorder %v20, 0
  %v37 = vsub.s32 0, %v20
  %v38 = vsel %vm36, %v37, %v20
  %v39 = vshrl.u32 %v38, 4
  %v40 = vand.u32 %v38, 15
  %v41 = vsub.s32 0, %v40
  %v42 = vsel %vm36, %v41, %v40
  %vm43 = vcmp.lt.s32.totalorder %v21, 0
  %v44 = vsub.s32 0, %v21
  %v45 = vsel %vm43, %v44, %v21
  %v46 = vshrl.u32 %v45, 4
  %v47 = vand.u32 %v45, 15
  %v48 = vsub.s32 0, %v47
  %v49 = vsel %vm43, %v48, %v47
  %vm50 = vcmp.ne.s32.totalorder %v28, 0
  %vm51 = vcmp.ne.s32.totalorder %v35, 0
  %vm52 = vcmp.ne.s32.totalorder %v42, 0
  %vm53 = vcmp.ne.s32.totalorder %v49, 0
  %vm54 = vcmp.lt.s32.totalorder %v28, 0
  %vm55 = vcmp.lt.s32.totalorder %v35, 0
  %vm56 = vcmp.lt.s32.totalorder %v42, 0
  %vm57 = vcmp.lt.s32.totalorder %v49, 0
  %vm58 = vmand %vm54, %vm50
  %vm59 = vmand %vm55, %vm51
  %vm60 = vmand %vm56, %vm52
  %vm61 = vmand %vm57, %vm53
  %v62 = vadd.s32 %v28, 16
  %v63 = vadd.s32 %v35, 16
  %v64 = vadd.s32 %v42, 16
  %v65 = vadd.s32 %v49, 16
  %v66 = vsel %vm58, %v62, %v28
  %v67 = vsel %vm59, %v63, %v35
  %v68 = vsel %vm60, %v64, %v42
  %v69 = vsel %vm61, %v65, %v49
  %vm70 = vcmp.gt.s32.totalorder %v66, 0
  %vm71 = vcmp.gt.s32.totalorder %v67, 0
  %vm72 = vcmp.gt.s32.totalorder %v68, 0
  %vm73 = vcmp.gt.s32.totalorder %v69, 0
  %vm74 = vcmp.lt.s32.totalorder %v66, 15
  %vm75 = vcmp.lt.s32.totalorder %v67, 15
  %vm76 = vcmp.lt.s32.totalorder %v68, 15
  %vm77 = vcmp.lt.s32.totalorder %v69, 15
  %v78 = vld [vmem:[%s0] sm:$0xff]
  %v79 = vld [vmem:[%s0 + $0x8] sm:$0xff]
  %v80 = vld [vmem:[%s0 + $0x10] sm:$0xff]
  %v81 = vld [vmem:[%s0 + $0x18] sm:$0xff]
  %v82 = vrot.slane %v78, 7
  %v83 = vrot.slane %v79, 7
  %v84 = vrot.slane %v80, 7
  %v85 = vrot.slane %v81, 7
  %vm86 = vcmp.lt.s32.totalorder %v18, 1
  %v87 = vsel %vm86, %v84, %v85
  %v88 = vsel %vm86, %v83, %v84
  %v89 = vsel %vm86, %v82, %v83
  %v90 = vsel %vm86, %v85, %v82
  %v91 = vsel %vm70, 1, 0
  %v92 = vsel %vm71, 1, 0
  %v93 = vsel %vm72, 1, 0
  %v94 = vsel %vm73, 1, 0
  %vm95 = vcmp.eq.s32.totalorder %v91, 1
  %vm96 = vcmp.eq.s32.totalorder %v92, 1
  %vm97 = vcmp.eq.s32.totalorder %v93, 1
  %vm98 = vcmp.eq.s32.totalorder %v94, 1
  %v99 = vsel %vm95, %v90, 0.0
  %v100 = vsel %vm96, %v89, 0.0
  %v101 = vsel %vm97, %v88, 0.0
  %v102 = vsel %vm98, %v87, 0.0
  %v103 = vrot.slane %v78, 1
  %v104 = vrot.slane %v79, 1
  %v105 = vrot.slane %v80, 1
  %v106 = vrot.slane %v81, 1
  %vm107 = vcmp.lt.s32.totalorder %v18, 7
  %v108 = vsel %vm107, %v105, %v106
  %v109 = vsel %vm107, %v104, %v105
  %v110 = vsel %vm107, %v103, %v104
  %v111 = vsel %vm107, %v106, %v103
  %v112 = vsel %vm74, 1, 0
  %v113 = vsel %vm75, 1, 0
  %v114 = vsel %vm76, 1, 0
  %v115 = vsel %vm77, 1, 0
  %vm116 = vcmp.eq.s32.totalorder %v112, 1
  %vm117 = vcmp.eq.s32.totalorder %v113, 1
  %vm118 = vcmp.eq.s32.totalorder %v114, 1
  %vm119 = vcmp.eq.s32.totalorder %v115, 1
  %v120 = vsel %vm116, %v110, 0.0
  %v121 = vsel %vm117, %v109, 0.0
  %v122 = vsel %vm118, %v108, 0.0
  %v123 = vsel %vm119, %v111, 0.0
  %v124 = vpack.c.bf16 %v100, %v99
  %v125 = vpack.c.bf16 %v79, %v78
  %v126 = vpack.c.bf16 %v121, %v120
  %v127 = vpack.c.bf16 %v102, %v101
  %v128 = vpack.c.bf16 %v81, %v80
  %v129 = vpack.c.bf16 %v123, %v122
  %v130 = vld [vmem:[%s1] sm:$0xff]
  %v131 = vld [vmem:[%s1 + $0x8] sm:$0xff]
  %v132 = vld [vmem:[%s1 + $0x10] sm:$0xff]
  %v133 = vld [vmem:[%s1 + $0x18] sm:$0xff]
  %v134 = vld [vmem:[%s1 + $0x20] sm:$0xff]
  %v135 = vld [vmem:[%s1 + $0x28] sm:$0xff]
  %v136 = vld [vmem:[%s1 + $0x30] sm:$0xff]
  %v137 = vld [vmem:[%s1 + $0x38] sm:$0xff]
  %v138 = vld [vmem:[%s1 + $0x40] sm:$0xff]
  %v139 = vld [vmem:[%s1 + $0x48] sm:$0xff]
  %v140 = vld [vmem:[%s1 + $0x50] sm:$0xff]
  %v141 = vld [vmem:[%s1 + $0x58] sm:$0xff]
  %v142 = vld [vmem:[%s1 + $0x60] sm:$0xff]
  %v143 = vld [vmem:[%s1 + $0x68] sm:$0xff]
  %v144 = vld [vmem:[%s1 + $0x70] sm:$0xff]
  %v145 = vld [vmem:[%s1 + $0x78] sm:$0xff]
  %v146 = vld [vmem:[%s1 + $0x80] sm:$0xff]
  %v147 = vld [vmem:[%s1 + $0x88] sm:$0xff]
  %v148 = vld [vmem:[%s1 + $0x90] sm:$0xff]
  %v149 = vld [vmem:[%s1 + $0x98] sm:$0xff]
  %v150 = vld [vmem:[%s1 + $0xa0] sm:$0xff]
  %v151 = vld [vmem:[%s1 + $0xa8] sm:$0xff]
  %v152 = vld [vmem:[%s1 + $0xb0] sm:$0xff]
  %v153 = vld [vmem:[%s1 + $0xb8] sm:$0xff]
  %v154 = vld [vmem:[%s1 + $0xc0] sm:$0xff]
  %v155 = vld [vmem:[%s1 + $0xc8] sm:$0xff]
  %v156 = vld [vmem:[%s1 + $0xd0] sm:$0xff]
  %v157 = vld [vmem:[%s1 + $0xd8] sm:$0xff]
  %v158 = vld [vmem:[%s1 + $0xe0] sm:$0xff]
  %v159 = vld [vmem:[%s1 + $0xe8] sm:$0xff]
  %v160 = vld [vmem:[%s1 + $0xf0] sm:$0xff]
  %v161 = vld [vmem:[%s1 + $0xf8] sm:$0xff]
  %v162 = vld [vmem:[%s1 + $0x100] sm:$0xff]
  %v163 = vld [vmem:[%s1 + $0x108] sm:$0xff]
  %v164 = vld [vmem:[%s1 + $0x110] sm:$0xff]
  %v165 = vld [vmem:[%s1 + $0x118] sm:$0xff]
  %v166 = vld [vmem:[%s1 + $0x120] sm:$0xff]
  %v167 = vld [vmem:[%s1 + $0x128] sm:$0xff]
  %v168 = vld [vmem:[%s1 + $0x130] sm:$0xff]
  %v169 = vld [vmem:[%s1 + $0x138] sm:$0xff]
  %v170 = vld [vmem:[%s1 + $0x140] sm:$0xff]
  %v171 = vld [vmem:[%s1 + $0x148] sm:$0xff]
  %v172 = vld [vmem:[%s1 + $0x150] sm:$0xff]
  %v173 = vld [vmem:[%s1 + $0x158] sm:$0xff]
  %v174 = vld [vmem:[%s1 + $0x160] sm:$0xff]
  %v175 = vld [vmem:[%s1 + $0x168] sm:$0xff]
  %v176 = vld [vmem:[%s1 + $0x170] sm:$0xff]
  %v177 = vld [vmem:[%s1 + $0x178] sm:$0xff]
  %v178 = vld [vmem:[%s3] ss:$2 sm:$0x3]
  %v180 = vperm.slane %v178, 0
  %v181 = vperm.slane %v178, 1
  %v232 = vunpack.c.l.b16 %v130
  %v233 = vunpack.c.h.b16 %v130
  %v234 = vunpack.c.l.b16 %v131
  %v235 = vunpack.c.h.b16 %v131
  %v236 = vunpack.c.l.b16 %v132
  %v237 = vunpack.c.h.b16 %v132
  %v238 = vunpack.c.l.b16 %v133
  %v239 = vunpack.c.h.b16 %v133
  %v240 = vunpack.c.l.b16 %v134
  %v241 = vunpack.c.h.b16 %v134
  %v242 = vunpack.c.l.b16 %v135
  %v243 = vunpack.c.h.b16 %v135
  %v244 = vunpack.c.l.b16 %v136
  %v245 = vunpack.c.h.b16 %v136
  %v246 = vunpack.c.l.b16 %v137
  %v247 = vunpack.c.h.b16 %v137
  %v248 = vunpack.c.l.b16 %v138
  %v249 = vunpack.c.h.b16 %v138
  %v250 = vunpack.c.l.b16 %v139
  %v251 = vunpack.c.h.b16 %v139
  %v252 = vunpack.c.l.b16 %v140
  %v253 = vunpack.c.h.b16 %v140
  %v254 = vunpack.c.l.b16 %v141
  %v255 = vunpack.c.h.b16 %v141
  %v256 = vunpack.c.l.b16 %v142
  %v257 = vunpack.c.h.b16 %v142
  %v258 = vunpack.c.l.b16 %v143
  %v259 = vunpack.c.h.b16 %v143
  %v260 = vunpack.c.l.b16 %v144
  %v261 = vunpack.c.h.b16 %v144
  %v262 = vunpack.c.l.b16 %v145
  %v263 = vunpack.c.h.b16 %v145
  %v264 = vunpack.c.l.b16 %v146
  %v265 = vunpack.c.h.b16 %v146
  %v266 = vunpack.c.l.b16 %v147
  %v267 = vunpack.c.h.b16 %v147
  %v268 = vunpack.c.l.b16 %v148
  %v269 = vunpack.c.h.b16 %v148
  %v270 = vunpack.c.l.b16 %v149
  %v271 = vunpack.c.h.b16 %v149
  %v272 = vunpack.c.l.b16 %v150
  %v273 = vunpack.c.h.b16 %v150
  %v274 = vunpack.c.l.b16 %v151
  %v275 = vunpack.c.h.b16 %v151
  %v276 = vunpack.c.l.b16 %v152
  %v277 = vunpack.c.h.b16 %v152
  %v278 = vunpack.c.l.b16 %v153
  %v279 = vunpack.c.h.b16 %v153
  %v280 = vunpack.c.l.b16 %v154
  %v281 = vunpack.c.h.b16 %v154
  %v282 = vunpack.c.l.b16 %v155
  %v283 = vunpack.c.h.b16 %v155
  %v284 = vunpack.c.l.b16 %v156
  %v285 = vunpack.c.h.b16 %v156
  %v286 = vunpack.c.l.b16 %v157
  %v287 = vunpack.c.h.b16 %v157
  %v288 = vunpack.c.l.b16 %v158
  %v289 = vunpack.c.h.b16 %v158
  %v290 = vunpack.c.l.b16 %v159
  %v291 = vunpack.c.h.b16 %v159
  %v292 = vunpack.c.l.b16 %v160
  %v293 = vunpack.c.h.b16 %v160
  %v294 = vunpack.c.l.b16 %v161
  %v295 = vunpack.c.h.b16 %v161
  %v296 = vunpack.c.l.b16 %v162
  %v297 = vunpack.c.h.b16 %v162
  %v298 = vunpack.c.l.b16 %v163
  %v299 = vunpack.c.h.b16 %v163
  %v300 = vunpack.c.l.b16 %v164
  %v301 = vunpack.c.h.b16 %v164
  %v302 = vunpack.c.l.b16 %v165
  %v303 = vunpack.c.h.b16 %v165
  %v304 = vunpack.c.l.b16 %v166
  %v305 = vunpack.c.h.b16 %v166
  %v306 = vunpack.c.l.b16 %v167
  %v307 = vunpack.c.h.b16 %v167
  %v308 = vunpack.c.l.b16 %v168
  %v309 = vunpack.c.h.b16 %v168
  %v310 = vunpack.c.l.b16 %v169
  %v311 = vunpack.c.h.b16 %v169
  %v312 = vunpack.c.l.b16 %v170
  %v313 = vunpack.c.h.b16 %v170
  %v314 = vunpack.c.l.b16 %v171
  %v315 = vunpack.c.h.b16 %v171
  %v316 = vunpack.c.l.b16 %v172
  %v317 = vunpack.c.h.b16 %v172
  %v318 = vunpack.c.l.b16 %v173
  %v319 = vunpack.c.h.b16 %v173
  %v320 = vunpack.c.l.b16 %v174
  %v321 = vunpack.c.h.b16 %v174
  %v322 = vunpack.c.l.b16 %v175
  %v323 = vunpack.c.h.b16 %v175
  %v324 = vunpack.c.l.b16 %v176
  %v325 = vunpack.c.h.b16 %v176
  %v326 = vunpack.c.l.b16 %v177
  %v327 = vunpack.c.h.b16 %v177
  %v328 = vpack.c.b16 %v234, %v232
  %v329 = vpack.c.b16 %v235, %v233
  %v330 = vpack.c.b16 %v238, %v236
  %v331 = vpack.c.b16 %v239, %v237
  %v332 = vpack.c.b16 %v242, %v240
  %v333 = vpack.c.b16 %v243, %v241
  %v334 = vpack.c.b16 %v246, %v244
  %v335 = vpack.c.b16 %v247, %v245
  %v336 = vpack.c.b16 %v250, %v248
  %v337 = vpack.c.b16 %v251, %v249
  %v338 = vpack.c.b16 %v254, %v252
  %v339 = vpack.c.b16 %v255, %v253
  %v340 = vpack.c.b16 %v258, %v256
  %v341 = vpack.c.b16 %v259, %v257
  %v342 = vpack.c.b16 %v262, %v260
  %v343 = vpack.c.b16 %v263, %v261
  %v344 = vpack.c.b16 %v266, %v264
  %v345 = vpack.c.b16 %v267, %v265
  %v346 = vpack.c.b16 %v270, %v268
  %v347 = vpack.c.b16 %v271, %v269
  %v348 = vpack.c.b16 %v274, %v272
  %v349 = vpack.c.b16 %v275, %v273
  %v350 = vpack.c.b16 %v278, %v276
  %v351 = vpack.c.b16 %v279, %v277
  %v352 = vpack.c.b16 %v282, %v280
  %v353 = vpack.c.b16 %v283, %v281
  %v354 = vpack.c.b16 %v286, %v284
  %v355 = vpack.c.b16 %v287, %v285
  %v356 = vpack.c.b16 %v290, %v288
  %v357 = vpack.c.b16 %v291, %v289
  %v358 = vpack.c.b16 %v294, %v292
  %v359 = vpack.c.b16 %v295, %v293
  %v360 = vpack.c.b16 %v298, %v296
  %v361 = vpack.c.b16 %v299, %v297
  %v362 = vpack.c.b16 %v302, %v300
  %v363 = vpack.c.b16 %v303, %v301
  %v364 = vpack.c.b16 %v306, %v304
  %v365 = vpack.c.b16 %v307, %v305
  %v366 = vpack.c.b16 %v310, %v308
  %v367 = vpack.c.b16 %v311, %v309
  %v368 = vpack.c.b16 %v314, %v312
  %v369 = vpack.c.b16 %v315, %v313
  %v370 = vpack.c.b16 %v318, %v316
  %v371 = vpack.c.b16 %v319, %v317
  %v372 = vpack.c.b16 %v322, %v320
  %v373 = vpack.c.b16 %v323, %v321
  %v374 = vpack.c.b16 %v326, %v324
  %v375 = vpack.c.b16 %v327, %v325
  %424 = vmatpush.bf16.msra.mxu0 %v342
  %425 = vmatpush.bf16.msra.mxu0 %v340
  %426 = vmatpush.bf16.msra.mxu0 %v338
  %427 = vmatpush.bf16.msra.mxu0 %v336
  %428 = vmatpush.bf16.msra.mxu0 %v334
  %429 = vmatpush.bf16.msra.mxu0 %v332
  %430 = vmatpush.bf16.msra.mxu0 %v330
  %431 = vmatpush.bf16.msra.mxu0 %v328
  %432 = vmatmul.bf16.gmra.mxu0 %v124
  %v433 = vpop.f32.mrf.mxu0
  %v434 = vadd.f32 %v180, %v433
  %v435 = vpop.f32.mrf.mxu0
  %v436 = vadd.f32 %v180, %v435
  %437 = vmatmul.bf16.gmra.mxu0 %v127
  %v438 = vpop.f32.mrf.mxu0
  %v439 = vadd.f32 %v180, %v438
  %v440 = vpop.f32.mrf.mxu0
  %v441 = vadd.f32 %v180, %v440
  %442 = vdwg.mxu0
  %443 = vmatpush.bf16.msra.mxu0 %v358
  %444 = vmatpush.bf16.msra.mxu0 %v356
  %445 = vmatpush.bf16.msra.mxu0 %v354
  %446 = vmatpush.bf16.msra.mxu0 %v352
  %447 = vmatpush.bf16.msra.mxu0 %v350
  %448 = vmatpush.bf16.msra.mxu0 %v348
  %449 = vmatpush.bf16.msra.mxu0 %v346
  %450 = vmatpush.bf16.msra.mxu0 %v344
  %451 = vmatmul.bf16.gmra.mxu0 %v125
  %v452 = vpop.f32.mrf.mxu0
  %v453 = vadd.f32 %v434, %v452
  %v454 = vpop.f32.mrf.mxu0
  %v455 = vadd.f32 %v436, %v454
  %456 = vmatmul.bf16.gmra.mxu0 %v128
  %v457 = vpop.f32.mrf.mxu0
  %v458 = vadd.f32 %v439, %v457
  %v459 = vpop.f32.mrf.mxu0
  %v460 = vadd.f32 %v441, %v459
  %461 = vdwg.mxu0
  %462 = vmatpush.bf16.msra.mxu0 %v374
  %463 = vmatpush.bf16.msra.mxu0 %v372
  %464 = vmatpush.bf16.msra.mxu0 %v370
  %465 = vmatpush.bf16.msra.mxu0 %v368
  %466 = vmatpush.bf16.msra.mxu0 %v366
  %467 = vmatpush.bf16.msra.mxu0 %v364
  %468 = vmatpush.bf16.msra.mxu0 %v362
  %469 = vmatpush.bf16.msra.mxu0 %v360
  %470 = vmatmul.bf16.gmra.mxu0 %v126
  %v471 = vpop.f32.mrf.mxu0
  %v472 = vadd.f32 %v453, %v471
  %v473 = vpop.f32.mrf.mxu0
  %v474 = vadd.f32 %v455, %v473
  %475 = vmatmul.bf16.gmra.mxu0 %v129
  %v476 = vpop.f32.mrf.mxu0
  %v477 = vadd.f32 %v458, %v476
  %v478 = vpop.f32.mrf.mxu0
  %v479 = vadd.f32 %v460, %v478
  %480 = vdwg.mxu0
  %481 = vmatpush.bf16.msra.mxu0 %v343
  %482 = vmatpush.bf16.msra.mxu0 %v341
  %483 = vmatpush.bf16.msra.mxu0 %v339
  %484 = vmatpush.bf16.msra.mxu0 %v337
  %485 = vmatpush.bf16.msra.mxu0 %v335
  %486 = vmatpush.bf16.msra.mxu0 %v333
  %487 = vmatpush.bf16.msra.mxu0 %v331
  %488 = vmatpush.bf16.msra.mxu0 %v329
  %489 = vmatmul.bf16.gmra.mxu0 %v124
  %v490 = vpop.f32.mrf.mxu0
  %v491 = vadd.f32 %v181, %v490
  %v492 = vpop.f32.mrf.mxu0
  %v493 = vadd.f32 %v181, %v492
  %494 = vmatmul.bf16.gmra.mxu0 %v127
  %v495 = vpop.f32.mrf.mxu0
  %v496 = vadd.f32 %v181, %v495
  %v497 = vpop.f32.mrf.mxu0
  %v498 = vadd.f32 %v181, %v497
  %499 = vdwg.mxu0
  %500 = vmatpush.bf16.msra.mxu0 %v359
  %501 = vmatpush.bf16.msra.mxu0 %v357
  %502 = vmatpush.bf16.msra.mxu0 %v355
  %503 = vmatpush.bf16.msra.mxu0 %v353
  %504 = vmatpush.bf16.msra.mxu0 %v351
  %505 = vmatpush.bf16.msra.mxu0 %v349
  %506 = vmatpush.bf16.msra.mxu0 %v347
  %507 = vmatpush.bf16.msra.mxu0 %v345
  %508 = vmatmul.bf16.gmra.mxu0 %v125
  %v509 = vpop.f32.mrf.mxu0
  %v510 = vadd.f32 %v491, %v509
  %v511 = vpop.f32.mrf.mxu0
  %v512 = vadd.f32 %v493, %v511
  %513 = vmatmul.bf16.gmra.mxu0 %v128
  %v514 = vpop.f32.mrf.mxu0
  %v515 = vadd.f32 %v496, %v514
  %v516 = vpop.f32.mrf.mxu0
  %v517 = vadd.f32 %v498, %v516
  %518 = vdwg.mxu0
  %519 = vmatpush.bf16.msra.mxu0 %v375
  %520 = vmatpush.bf16.msra.mxu0 %v373
  %521 = vmatpush.bf16.msra.mxu0 %v371
  %522 = vmatpush.bf16.msra.mxu0 %v369
  %523 = vmatpush.bf16.msra.mxu0 %v367
  %524 = vmatpush.bf16.msra.mxu0 %v365
  %525 = vmatpush.bf16.msra.mxu0 %v363
  %526 = vmatpush.bf16.msra.mxu0 %v361
  %527 = vmatmul.bf16.gmra.mxu0 %v126
  %v528 = vpop.f32.mrf.mxu0
  %v529 = vadd.f32 %v510, %v528
  %v530 = vpop.f32.mrf.mxu0
  %v531 = vadd.f32 %v512, %v530
  %532 = vmatmul.bf16.gmra.mxu0 %v129
  %v533 = vpop.f32.mrf.mxu0
  %v534 = vadd.f32 %v515, %v533
  %v535 = vpop.f32.mrf.mxu0
  %v536 = vadd.f32 %v517, %v535
  %537 = vdwg.mxu0
  %v538 = vmax.f32 %v472, 0.0
  %v539 = vmax.f32 %v474, 0.0
  %v540 = vmax.f32 %v477, 0.0
  %v541 = vmax.f32 %v479, 0.0
  %v542 = vrot.slane %v538, 7
  %v543 = vrot.slane %v539, 7
  %v544 = vrot.slane %v540, 7
  %v545 = vrot.slane %v541, 7
  %v546 = vsel %vm86, %v544, %v545
  %v547 = vsel %vm86, %v543, %v544
  %v548 = vsel %vm86, %v542, %v543
  %v549 = vsel %vm86, %v545, %v542
  %v550 = vsel %vm95, %v549, 0.0
  %v551 = vsel %vm96, %v548, 0.0
  %v552 = vsel %vm97, %v547, 0.0
  %v553 = vsel %vm98, %v546, 0.0
  %v554 = vrot.slane %v538, 1
  %v555 = vrot.slane %v539, 1
  %v556 = vrot.slane %v540, 1
  %v557 = vrot.slane %v541, 1
  %v558 = vsel %vm107, %v556, %v557
  %v559 = vsel %vm107, %v555, %v556
  %v560 = vsel %vm107, %v554, %v555
  %v561 = vsel %vm107, %v557, %v554
  %v562 = vsel %vm116, %v560, 0.0
  %v563 = vsel %vm117, %v559, 0.0
  %v564 = vsel %vm118, %v558, 0.0
  %v565 = vsel %vm119, %v561, 0.0
  %v566 = vpack.c.bf16 %v551, %v550
  %v567 = vpack.c.bf16 %v539, %v538
  %v568 = vpack.c.bf16 %v563, %v562
  %v569 = vpack.c.bf16 %v553, %v552
  %v570 = vpack.c.bf16 %v541, %v540
  %v571 = vpack.c.bf16 %v565, %v564
  %v572 = vld [vmem:[%s2] sm:$0xf]
  %v573 = vld [vmem:[%s2 + $0x4] sm:$0xf]
  %v574 = vld [vmem:[%s2 + $0x8] sm:$0xf]
  %v575 = vld [vmem:[%s2 + $0xc] sm:$0xf]
  %v576 = vld [vmem:[%s2 + $0x10] sm:$0xf]
  %v577 = vld [vmem:[%s2 + $0x14] sm:$0xf]
  %v578 = vld [vmem:[%s2 + $0x18] sm:$0xf]
  %v579 = vld [vmem:[%s2 + $0x1c] sm:$0xf]
  %v580 = vld [vmem:[%s2 + $0x20] sm:$0xf]
  %v581 = vld [vmem:[%s2 + $0x24] sm:$0xf]
  %v582 = vld [vmem:[%s2 + $0x28] sm:$0xf]
  %v583 = vld [vmem:[%s2 + $0x2c] sm:$0xf]
  %v584 = vld [vmem:[%s2 + $0x30] sm:$0xf]
  %v585 = vld [vmem:[%s2 + $0x34] sm:$0xf]
  %v586 = vld [vmem:[%s2 + $0x38] sm:$0xf]
  %v587 = vld [vmem:[%s2 + $0x3c] sm:$0xf]
  %v588 = vld [vmem:[%s2 + $0x40] sm:$0xf]
  %v589 = vld [vmem:[%s2 + $0x44] sm:$0xf]
  %v590 = vld [vmem:[%s2 + $0x48] sm:$0xf]
  %v591 = vld [vmem:[%s2 + $0x4c] sm:$0xf]
  %v592 = vld [vmem:[%s2 + $0x50] sm:$0xf]
  %v593 = vld [vmem:[%s2 + $0x54] sm:$0xf]
  %v594 = vld [vmem:[%s2 + $0x58] sm:$0xf]
  %v595 = vld [vmem:[%s2 + $0x5c] sm:$0xf]
  %v596 = vld [vmem:[%s2 + $0x60] sm:$0xf]
  %v597 = vld [vmem:[%s2 + $0x64] sm:$0xf]
  %v598 = vld [vmem:[%s2 + $0x68] sm:$0xf]
  %v599 = vld [vmem:[%s2 + $0x6c] sm:$0xf]
  %v600 = vld [vmem:[%s2 + $0x70] sm:$0xf]
  %v601 = vld [vmem:[%s2 + $0x74] sm:$0xf]
  %v602 = vld [vmem:[%s2 + $0x78] sm:$0xf]
  %v603 = vld [vmem:[%s2 + $0x7c] sm:$0xf]
  %v604 = vld [vmem:[%s2 + $0x80] sm:$0xf]
  %v605 = vld [vmem:[%s2 + $0x84] sm:$0xf]
  %v606 = vld [vmem:[%s2 + $0x88] sm:$0xf]
  %v607 = vld [vmem:[%s2 + $0x8c] sm:$0xf]
  %v608 = vld [vmem:[%s2 + $0x90] sm:$0xf]
  %v609 = vld [vmem:[%s2 + $0x94] sm:$0xf]
  %v610 = vld [vmem:[%s2 + $0x98] sm:$0xf]
  %v611 = vld [vmem:[%s2 + $0x9c] sm:$0xf]
  %v612 = vld [vmem:[%s2 + $0xa0] sm:$0xf]
  %v613 = vld [vmem:[%s2 + $0xa4] sm:$0xf]
  %v614 = vld [vmem:[%s2 + $0xa8] sm:$0xf]
  %v615 = vld [vmem:[%s2 + $0xac] sm:$0xf]
  %v616 = vld [vmem:[%s2 + $0xb0] sm:$0xf]
  %v617 = vld [vmem:[%s2 + $0xb4] sm:$0xf]
  %v618 = vld [vmem:[%s2 + $0xb8] sm:$0xf]
  %v619 = vld [vmem:[%s2 + $0xbc] sm:$0xf]
  %v620 = vld [vmem:[%s3 + $0x1] sm:$0x1]
  %v621 = vperm.slane %v620, 0
  %v670 = vunpack.c.l.b16 %v572
  %v671 = vunpack.c.l.b16 %v573
  %v672 = vunpack.c.l.b16 %v574
  %v673 = vunpack.c.l.b16 %v575
  %v674 = vunpack.c.l.b16 %v576
  %v675 = vunpack.c.l.b16 %v577
  %v676 = vunpack.c.l.b16 %v578
  %v677 = vunpack.c.l.b16 %v579
  %v678 = vunpack.c.l.b16 %v580
  %v679 = vunpack.c.l.b16 %v581
  %v680 = vunpack.c.l.b16 %v582
  %v681 = vunpack.c.l.b16 %v583
  %v682 = vunpack.c.l.b16 %v584
  %v683 = vunpack.c.l.b16 %v585
  %v684 = vunpack.c.l.b16 %v586
  %v685 = vunpack.c.l.b16 %v587
  %v686 = vunpack.c.l.b16 %v588
  %v687 = vunpack.c.l.b16 %v589
  %v688 = vunpack.c.l.b16 %v590
  %v689 = vunpack.c.l.b16 %v591
  %v690 = vunpack.c.l.b16 %v592
  %v691 = vunpack.c.l.b16 %v593
  %v692 = vunpack.c.l.b16 %v594
  %v693 = vunpack.c.l.b16 %v595
  %v694 = vunpack.c.l.b16 %v596
  %v695 = vunpack.c.l.b16 %v597
  %v696 = vunpack.c.l.b16 %v598
  %v697 = vunpack.c.l.b16 %v599
  %v698 = vunpack.c.l.b16 %v600
  %v699 = vunpack.c.l.b16 %v601
  %v700 = vunpack.c.l.b16 %v602
  %v701 = vunpack.c.l.b16 %v603
  %v702 = vunpack.c.l.b16 %v604
  %v703 = vunpack.c.l.b16 %v605
  %v704 = vunpack.c.l.b16 %v606
  %v705 = vunpack.c.l.b16 %v607
  %v706 = vunpack.c.l.b16 %v608
  %v707 = vunpack.c.l.b16 %v609
  %v708 = vunpack.c.l.b16 %v610
  %v709 = vunpack.c.l.b16 %v611
  %v710 = vunpack.c.l.b16 %v612
  %v711 = vunpack.c.l.b16 %v613
  %v712 = vunpack.c.l.b16 %v614
  %v713 = vunpack.c.l.b16 %v615
  %v714 = vunpack.c.l.b16 %v616
  %v715 = vunpack.c.l.b16 %v617
  %v716 = vunpack.c.l.b16 %v618
  %v717 = vunpack.c.l.b16 %v619
  %v718 = vpack.c.b16 %v671, %v670
  %v719 = vpack.c.b16 %v673, %v672
  %v720 = vpack.c.b16 %v675, %v674
  %v721 = vpack.c.b16 %v677, %v676
  %v722 = vpack.c.b16 %v679, %v678
  %v723 = vpack.c.b16 %v681, %v680
  %v724 = vpack.c.b16 %v683, %v682
  %v725 = vpack.c.b16 %v685, %v684
  %v726 = vpack.c.b16 %v687, %v686
  %v727 = vpack.c.b16 %v689, %v688
  %v728 = vpack.c.b16 %v691, %v690
  %v729 = vpack.c.b16 %v693, %v692
  %v730 = vpack.c.b16 %v695, %v694
  %v731 = vpack.c.b16 %v697, %v696
  %v732 = vpack.c.b16 %v699, %v698
  %v733 = vpack.c.b16 %v701, %v700
  %v734 = vpack.c.b16 %v703, %v702
  %v735 = vpack.c.b16 %v705, %v704
  %v736 = vpack.c.b16 %v707, %v706
  %v737 = vpack.c.b16 %v709, %v708
  %v738 = vpack.c.b16 %v711, %v710
  %v739 = vpack.c.b16 %v713, %v712
  %v740 = vpack.c.b16 %v715, %v714
  %v741 = vpack.c.b16 %v717, %v716
  %766 = vmatpush.bf16.msra.mxu0 %v725
  %767 = vmatpush.bf16.msra.mxu0 %v724
  %768 = vmatpush.bf16.msra.mxu0 %v723
  %769 = vmatpush.bf16.msra.mxu0 %v722
  %770 = vmatpush.bf16.msra.mxu0 %v721
  %771 = vmatpush.bf16.msra.mxu0 %v720
  %772 = vmatpush.bf16.msra.mxu0 %v719
  %773 = vmatpush.bf16.msra.mxu0 %v718
  %774 = vmatmul.bf16.gmra.mxu0 %v566
  %v775 = vpop.f32.mrf.mxu0
  %v776 = vadd.f32 %v621, %v775
  %v777 = vpop.f32.mrf.mxu0
  %v778 = vadd.f32 %v621, %v777
  %779 = vmatmul.bf16.gmra.mxu0 %v569
  %v780 = vpop.f32.mrf.mxu0
  %v781 = vadd.f32 %v621, %v780
  %v782 = vpop.f32.mrf.mxu0
  %v783 = vadd.f32 %v621, %v782
  %784 = vdwg.mxu0
  %785 = vmatpush.bf16.msra.mxu0 %v733
  %786 = vmatpush.bf16.msra.mxu0 %v732
  %787 = vmatpush.bf16.msra.mxu0 %v731
  %788 = vmatpush.bf16.msra.mxu0 %v730
  %789 = vmatpush.bf16.msra.mxu0 %v729
  %790 = vmatpush.bf16.msra.mxu0 %v728
  %791 = vmatpush.bf16.msra.mxu0 %v727
  %792 = vmatpush.bf16.msra.mxu0 %v726
  %793 = vmatmul.bf16.gmra.mxu0 %v567
  %v794 = vpop.f32.mrf.mxu0
  %v795 = vadd.f32 %v776, %v794
  %v796 = vpop.f32.mrf.mxu0
  %v797 = vadd.f32 %v778, %v796
  %798 = vmatmul.bf16.gmra.mxu0 %v570
  %v799 = vpop.f32.mrf.mxu0
  %v800 = vadd.f32 %v781, %v799
  %v801 = vpop.f32.mrf.mxu0
  %v802 = vadd.f32 %v783, %v801
  %803 = vdwg.mxu0
  %804 = vmatpush.bf16.msra.mxu0 %v741
  %805 = vmatpush.bf16.msra.mxu0 %v740
  %806 = vmatpush.bf16.msra.mxu0 %v739
  %807 = vmatpush.bf16.msra.mxu0 %v738
  %808 = vmatpush.bf16.msra.mxu0 %v737
  %809 = vmatpush.bf16.msra.mxu0 %v736
  %810 = vmatpush.bf16.msra.mxu0 %v735
  %811 = vmatpush.bf16.msra.mxu0 %v734
  %812 = vmatmul.bf16.gmra.mxu0 %v568
  %v813 = vpop.f32.mrf.mxu0
  %v814 = vadd.f32 %v795, %v813
  %v815 = vpop.f32.mrf.mxu0
  %v816 = vadd.f32 %v797, %v815
  %817 = vmatmul.bf16.gmra.mxu0 %v571
  %v818 = vpop.f32.mrf.mxu0
  %v819 = vadd.f32 %v800, %v818
  %v820 = vpop.f32.mrf.mxu0
  %v821 = vadd.f32 %v802, %v820
  %822 = vdwg.mxu0
  %v823 = vadd.f32 %v814, %v529
  %v824 = vadd.f32 %v816, %v531
  %v825 = vadd.f32 %v819, %v534
  %v826 = vadd.f32 %v821, %v536
  %v827 = vmax.f32 %v823, 0.0
  %v828 = vmax.f32 %v824, 0.0
  %v829 = vmax.f32 %v825, 0.0
  %v830 = vmax.f32 %v826, 0.0
  %v831 = vpack.c.bf16 %v827, %v827
  %v832 = vpack.c.bf16 %v828, %v828
  %v833 = vpack.c.bf16 %v829, %v829
  %v834 = vpack.c.bf16 %v830, %v830
  %835 = vst [vmem:[%s4] sm:$0xf] %v831
  %836 = vst [vmem:[%s4 + $0x4] sm:$0xf] %v832
  %837 = vst [vmem:[%s4 + $0x8] sm:$0xf] %v833
  %838 = vst [vmem:[%s4 + $0xc] sm:$0xf] %v834
  // Predicated region
  $region18: #{basic_block_apply.1} parent=0 // pred_check
    _
  $region19: #{basic_block_apply.1} parent=0 // pred_check_branch
    %840 = sbr.rel (0) target = $region21
  $region20: #{basic_block_apply.1} parent=0 // pred_region
    _
  $region21: #{basic_block_apply.1} parent=0 // pred_fallthru
    _
  // Predicated region
  $region22: #{basic_block_apply.1} parent=0 // pred_check
    _
  $region23: #{basic_block_apply.1} parent=0 // pred_check_branch
    %842 = sbr.rel (0) target = $region25
  $region24: #{basic_block_apply.1} parent=0 // pred_region
    _
  $region25: #{basic_block_apply.1} parent=0 // pred_fallthru
    _

</llo_original>
